<compile_context>
chip_gen: v7x
topology: tpu7x:2x2x1
jax: 0.10.0
libtpu: 0.0.40
codegen_flags: <defaults>
</compile_context>

<pallas_src>
import functools

import jax
import jax.numpy as jnp
from jax.experimental import pallas as pl
from jax.experimental.pallas import tpu as pltpu

LANES = 128


def _nanmean_kernel(loss_ref, w_ref, out_ref, sum_sc, cnt_sc, *,
                    eps, total_rows, block_rows):
    """Grid axis 0 walks row-blocks of the loss; (1,1) scratch accumulates."""
    i = pl.program_id(0)

    @pl.when(i == 0)
    def _init():
        sum_sc[...] = jnp.zeros_like(sum_sc)
        cnt_sc[...] = jnp.zeros_like(cnt_sc)

    # Weights are a tiny (1, n) resident tile: reciprocal / log are computed
    # once per block and broadcast over all rows by the VPU.
    w = w_ref[...].astype(jnp.float32)
    inv = pl.reciprocal(eps + w * w, approx=False)        # cheap, (1, n)
    reg = jnp.log(eps + w)                                 # EUP, (1, n)

    loss = loss_ref[...].astype(jnp.float32)               # (block_rows, n)
    val = loss * inv + reg                                  # (1,n) broadcast over rows

    def _accumulate(mask_tail_rows):
        valid = jnp.logical_not(jnp.isnan(val))             # torch.nanmean semantics
        if mask_tail_rows:
            # Row-level index check (no flat int32 index -> no overflow risk).
            row = jax.lax.broadcasted_iota(jnp.int32, val.shape, 0) + i * block_rows
            valid = jnp.logical_and(valid, row < total_rows)
        vm = jnp.where(valid, val, 0.0)
        cm = jnp.where(valid, 1.0, 0.0)
        # Rows first (VPU adds across vregs), then ONE cross-lane (XLU) reduce.
        sum_sc[...] += jnp.sum(jnp.sum(vm, axis=0, keepdims=True),
                               axis=1, keepdims=True)
        cnt_sc[...] += jnp.sum(jnp.sum(cm, axis=0, keepdims=True),
                               axis=1, keepdims=True)

    if total_rows % block_rows == 0:
        _accumulate(False)                                  # no tail -> no row mask at all
    else:
        last = pl.num_programs(0) - 1
        pl.when(i != last)(lambda: _accumulate(False))      # interior: isnan mask only
        pl.when(i == last)(lambda: _accumulate(True))       # tail: + in-range mask

    @pl.when(i == pl.num_programs(0) - 1)
    def _finalize():
        # 0/0 -> NaN, matching torch.nanmean on an all-NaN input.
        out_ref[...] = (sum_sc[...] / cnt_sc[...]).astype(out_ref.dtype)


def _elementwise_kernel(loss_ref, w_ref, out_ref, *, eps):
    w = w_ref[...].astype(jnp.float32)
    inv = pl.reciprocal(eps + w * w, approx=False)          # (1, n)
    reg = jnp.log(eps + w)                                   # (1, n)
    loss = loss_ref[...].astype(jnp.float32)                 # (block_rows, n)
    out_ref[...] = (loss * inv + reg).astype(out_ref.dtype)


@functools.partial(jax.jit, static_argnames=("eps", "pooling", "block_rows"))
def loss_balancer(loss, loss_weights, *, eps=1e-8, pooling="mean", block_rows=512):
    """Pallas implementation of LossBalancer.forward.

    loss:         (..., n_losses) (or any shape broadcastable with the weights).
    loss_weights: (n_losses,) parameter vector.
    Returns a scalar for pooling='mean', otherwise the elementwise result.
    """
    loss = jnp.asarray(loss)
    w = jnp.asarray(loss_weights)
    n = w.shape[-1]
    out_dtype = jnp.result_type(loss.dtype, w.dtype)
    full_shape = jnp.broadcast_shapes(loss.shape, w.shape)

    # Common case (weights broadcast along the trailing axis): the weight
    # vector is NOT materialized to the loss shape -- it rides along as a
    # (1, n) operand and broadcasts inside the kernel body.
    if loss.ndim >= 1 and loss.shape[-1] == n:
        loss2d = loss.reshape(-1, n)
    else:
        # Uncommon broadcast pattern (e.g. scalar loss): materialize once.
        loss2d = jnp.broadcast_to(loss, full_shape).reshape(-1, n)
    w2d = w.reshape(1, n)
    rows = loss2d.shape[0]

    # Row-block sizing: cap the per-block footprint (~1 MiB lane-padded) so a
    # double-buffered (in + out) pipeline fits every generation's scoped VMEM
    # with headroom; stay on sublane granularity for the dtype.
    itemsize = loss.dtype.itemsize
    gran = {4: 8, 2: 16, 1: 32}.get(itemsize, 8)
    lane_n = max(n, LANES)                                   # VMEM lane padding
    max_rows = max(gran, ((1 << 20) // (lane_n * itemsize)) // gran * gran)
    bm = max(gran, (min(block_rows, max_rows) // gran) * gran)
    if rows <= bm:
        bm = rows                                            # single full-array block
    grid = (pl.cdiv(rows, bm),)

    loss_spec = pl.BlockSpec((bm, n), lambda i: (i, 0))
    w_spec = pl.BlockSpec((1, n), lambda i: (0, 0))          # resident, same block each step

    if pooling == "mean":
        out = pl.pallas_call(
            functools.partial(_nanmean_kernel, eps=float(eps),
                              total_rows=rows, block_rows=bm),
            out_shape=jax.ShapeDtypeStruct((1, 1), out_dtype),
            grid=grid,
            in_specs=[loss_spec, w_spec],
            out_specs=pl.BlockSpec((1, 1), lambda i: (0, 0)),
            scratch_shapes=[pltpu.VMEM((1, 1), jnp.float32),
                            pltpu.VMEM((1, 1), jnp.float32)],
            compiler_params=pltpu.CompilerParams(
                dimension_semantics=("arbitrary",)),
        )(loss2d, w2d)
        return out[0, 0]
    else:
        out2d = pl.pallas_call(
            functools.partial(_elementwise_kernel, eps=float(eps)),
            out_shape=jax.ShapeDtypeStruct((rows, n), out_dtype),
            grid=grid,
            in_specs=[loss_spec, w_spec],
            out_specs=pl.BlockSpec((bm, n), lambda i: (i, 0)),
            compiler_params=pltpu.CompilerParams(
                dimension_semantics=("parallel",)),
        )(loss2d, w2d)
        return out2d.reshape(full_shape)


def _reference(loss, weights, eps=1e-8, pooling="mean"):
    balanced = loss / (eps + weights ** 2)
    regularized = jnp.log(eps + weights)
    val = balanced + regularized
    if pooling == "mean":
        return jnp.nanmean(val)
    return val


if __name__ == "__main__":
    n_losses = 8
    key = jax.random.PRNGKey(0)
    k1, k2, k3 = jax.random.split(key, 3)

    # LossBalancer initializes weights to ones; perturb slightly so the test
    # is non-degenerate (emulates a trained state).
    loss_weights = jnp.ones((n_losses,), jnp.float32) \
        + 0.1 * jax.random.normal(k2, (n_losses,), jnp.float32)

    # Case 1: canonical per-loss vector, with one NaN (exercises nanmean).
    loss_vec = jax.random.normal(k1, (n_losses,), jnp.float32) ** 2
    loss_vec = loss_vec.at[3].set(jnp.nan)

    # Case 2: small batched loss broadcast against the weight vector. 13 rows
    # with block_rows=8 exercises the multi-block grid, the resident weight
    # block, and the tail-row mask branch -- all at tiny shapes.
    loss_batched = jax.random.normal(k3, (13, n_losses), jnp.float32) ** 2
    loss_batched = loss_batched.at[5, 2].set(jnp.nan)

    out_mean = jax.block_until_ready(loss_balancer(loss_vec, loss_weights))
    out_none = jax.block_until_ready(
        loss_balancer(loss_vec, loss_weights, pooling="none"))
    out_mean_b = jax.block_until_ready(
        loss_balancer(loss_batched, loss_weights, block_rows=8))
    out_none_b = jax.block_until_ready(
        loss_balancer(loss_batched, loss_weights, pooling="none", block_rows=8))

    ref_mean = _reference(loss_vec, loss_weights, pooling="mean")
    ref_none = _reference(loss_vec, loss_weights, pooling="none")
    ref_mean_b = _reference(loss_batched, loss_weights, pooling="mean")
    ref_none_b = _reference(loss_batched, loss_weights, pooling="none")

    assert out_mean.shape == ()
    assert out_none.shape == (n_losses,)
    assert out_mean_b.shape == ()
    assert out_none_b.shape == (13, n_losses)
    assert jnp.allclose(out_mean, ref_mean, atol=1e-5, rtol=1e-5)
    assert jnp.allclose(out_none, ref_none, atol=1e-5, rtol=1e-5, equal_nan=True)
    assert jnp.allclose(out_mean_b, ref_mean_b, atol=1e-5, rtol=1e-5)
    assert jnp.allclose(out_none_b, ref_none_b, atol=1e-5, rtol=1e-5, equal_nan=True)

    print("KERNEL_OK")
</pallas_src>

<mosaic_0001>
module attributes {stable_mosaic.version = 11 : i64} {
  func.func @_nanmean_kernel(%arg0: i32, %arg1: memref<1x8xf32, #tpu.memory_space<vmem>>, %arg2: memref<1x8xf32, #tpu.memory_space<vmem>>, %arg3: memref<1x1xf32, #tpu.memory_space<vmem>>, %arg4: memref<1x1xf32, #tpu.memory_space<vmem>>, %arg5: memref<1x1xf32, #tpu.memory_space<vmem>>) attributes {dimension_semantics = [#tpu.dimension_semantics<arbitrary>], iteration_bounds = array<i64: 1>, scalar_prefetch = 0 : i64, scratch_operands = 2 : i64, tpu.core_type = #tpu.core_type<tc>, window_params = [{transform_indices = @transform_0, window_bounds = array<i64: 1, 8>}, {pipeline_mode = #tpu.pipeline_mode<synchronous>, transform_indices = @transform_1, window_bounds = array<i64: 1, 8>}, {pipeline_mode = #tpu.pipeline_mode<synchronous>, transform_indices = @transform_2, window_bounds = array<i64: 1, 1>}]} {
    %c0_i32 = arith.constant 0 : i32
    %0 = arith.cmpi eq, %arg0, %c0_i32 : i32
    %1 = arith.extui %0 : i1 to i32
    %c0_i32_0 = arith.constant 0 : i32
    %2 = arith.cmpi ne, %1, %c0_i32_0 : i32
    scf.if %2 {
      %cst_23 = arith.constant 0.000000e+00 : f32
      %38 = vector.broadcast %cst_23 : f32 to vector<1x1xf32>
      %c0_24 = arith.constant 0 : index
      %c0_25 = arith.constant 0 : index
      %39 = vector.load %arg4[%c0_24, %c0_25] : memref<1x1xf32, #tpu.memory_space<vmem>>, vector<1x1xf32>
      tpu.vector_store %arg4[%c0_24, %c0_25], %38 {strides = array<i32>} : memref<1x1xf32, #tpu.memory_space<vmem>>, vector<1x1xf32>,
      %cst_26 = arith.constant 0.000000e+00 : f32
      %40 = vector.broadcast %cst_26 : f32 to vector<1x1xf32>
      %c0_27 = arith.constant 0 : index
      %c0_28 = arith.constant 0 : index
      %41 = vector.load %arg5[%c0_27, %c0_28] : memref<1x1xf32, #tpu.memory_space<vmem>>, vector<1x1xf32>
      tpu.vector_store %arg5[%c0_27, %c0_28], %40 {strides = array<i32>} : memref<1x1xf32, #tpu.memory_space<vmem>>, vector<1x1xf32>,
    } else {
    }
    %c0 = arith.constant 0 : index
    %c0_1 = arith.constant 0 : index
    %3 = vector.load %arg2[%c0, %c0_1] : memref<1x8xf32, #tpu.memory_space<vmem>>, vector<1x8xf32>
    %4 = arith.mulf %3, %3 : vector<1x8xf32>
    %cst = arith.constant 9.99999993E-9 : f32
    %5 = vector.broadcast %cst : f32 to vector<1x8xf32>
    %6 = arith.addf %5, %4 : vector<1x8xf32>
    %7 = tpu.reciprocal %6 : vector<1x8xf32> -> vector<1x8xf32>
    %cst_2 = arith.constant 9.99999993E-9 : f32
    %8 = vector.broadcast %cst_2 : f32 to vector<1x8xf32>
    %9 = arith.addf %8, %3 : vector<1x8xf32>
    %10 = math.log %9 : vector<1x8xf32>
    %c0_3 = arith.constant 0 : index
    %c0_4 = arith.constant 0 : index
    %11 = vector.load %arg1[%c0_3, %c0_4] : memref<1x8xf32, #tpu.memory_space<vmem>>, vector<1x8xf32>
    %12 = arith.mulf %11, %7 : vector<1x8xf32>
    %13 = arith.addf %12, %10 : vector<1x8xf32>
    %14 = arith.cmpf one, %13, %13 : vector<1x8xf32>
    %cst_5 = arith.constant dense<true> : vector<1x8xi1>
    %15 = arith.xori %14, %cst_5 : vector<1x8xi1>
    %cst_6 = arith.constant 0.000000e+00 : f32
    %16 = vector.broadcast %cst_6 : f32 to vector<1x8xf32>
    %17 = arith.select %15, %13, %16 : vector<1x8xi1>, vector<1x8xf32>
    %cst_7 = arith.constant 1.000000e+00 : f32
    %cst_8 = arith.constant 0.000000e+00 : f32
    %18 = vector.broadcast %cst_7 : f32 to vector<1x8xf32>
    %19 = vector.broadcast %cst_8 : f32 to vector<1x8xf32>
    %20 = arith.select %15, %18, %19 : vector<1x8xi1>, vector<1x8xf32>
    %c0_9 = arith.constant 0 : index
    %c0_10 = arith.constant 0 : index
    %21 = vector.load %arg4[%c0_9, %c0_10] : memref<1x1xf32, #tpu.memory_space<vmem>>, vector<1x1xf32>
    %cst_11 = arith.constant dense<0.000000e+00> : vector<8xf32>
    %22 = vector.multi_reduction <add>, %17, %cst_11 [0] : vector<1x8xf32> to vector<8xf32>
    %23 = vector.shape_cast %22 : vector<8xf32> to vector<1x8xf32>
    %cst_12 = arith.constant dense<0.000000e+00> : vector<1xf32>
    %24 = vector.multi_reduction <add>, %23, %cst_12 [1] : vector<1x8xf32> to vector<1xf32>
    %25 = vector.shape_cast %24 : vector<1xf32> to vector<1x1xf32>
    %26 = arith.addf %21, %25 : vector<1x1xf32>
    %c0_13 = arith.constant 0 : index
    %c0_14 = arith.constant 0 : index
    %27 = vector.load %arg4[%c0_13, %c0_14] : memref<1x1xf32, #tpu.memory_space<vmem>>, vector<1x1xf32>
    tpu.vector_store %arg4[%c0_13, %c0_14], %26 {strides = array<i32>} : memref<1x1xf32, #tpu.memory_space<vmem>>, vector<1x1xf32>,
    %c0_15 = arith.constant 0 : index
    %c0_16 = arith.constant 0 : index
    %28 = vector.load %arg5[%c0_15, %c0_16] : memref<1x1xf32, #tpu.memory_space<vmem>>, vector<1x1xf32>
    %cst_17 = arith.constant dense<0.000000e+00> : vector<8xf32>
    %29 = vector.multi_reduction <add>, %20, %cst_17 [0] : vector<1x8xf32> to vector<8xf32>
    %30 = vector.shape_cast %29 : vector<8xf32> to vector<1x8xf32>
    %cst_18 = arith.constant dense<0.000000e+00> : vector<1xf32>
    %31 = vector.multi_reduction <add>, %30, %cst_18 [1] : vector<1x8xf32> to vector<1xf32>
    %32 = vector.shape_cast %31 : vector<1xf32> to vector<1x1xf32>
    %33 = arith.addf %28, %32 : vector<1x1xf32>
    %c0_19 = arith.constant 0 : index
    %c0_20 = arith.constant 0 : index
    %34 = vector.load %arg5[%c0_19, %c0_20] : memref<1x1xf32, #tpu.memory_space<vmem>>, vector<1x1xf32>
    tpu.vector_store %arg5[%c0_19, %c0_20], %33 {strides = array<i32>} : memref<1x1xf32, #tpu.memory_space<vmem>>, vector<1x1xf32>,
    %c0_i32_21 = arith.constant 0 : i32
    %35 = arith.cmpi eq, %arg0, %c0_i32_21 : i32
    %36 = arith.extui %35 : i1 to i32
    %c0_i32_22 = arith.constant 0 : i32
    %37 = arith.cmpi ne, %36, %c0_i32_22 : i32
    scf.if %37 {
      %c0_23 = arith.constant 0 : index
      %c0_24 = arith.constant 0 : index
      %38 = vector.load %arg4[%c0_23, %c0_24] : memref<1x1xf32, #tpu.memory_space<vmem>>, vector<1x1xf32>
      %c0_25 = arith.constant 0 : index
      %c0_26 = arith.constant 0 : index
      %39 = vector.load %arg5[%c0_25, %c0_26] : memref<1x1xf32, #tpu.memory_space<vmem>>, vector<1x1xf32>
      %40 = arith.divf %38, %39 : vector<1x1xf32>
      %c0_27 = arith.constant 0 : index
      %c0_28 = arith.constant 0 : index
      %41 = vector.load %arg3[%c0_27, %c0_28] : memref<1x1xf32, #tpu.memory_space<vmem>>, vector<1x1xf32>
      tpu.vector_store %arg3[%c0_27, %c0_28], %40 {strides = array<i32>} : memref<1x1xf32, #tpu.memory_space<vmem>>, vector<1x1xf32>,
    } else {
    }
    return
  }
  func.func @transform_0(%arg0: i32) -> (i32, i32) {
    %c0_i32 = arith.constant 0 : i32
    %c0_i32_0 = arith.constant 0 : i32
    return %arg0, %c0_i32 : i32, i32
  }
  func.func @transform_1(%arg0: i32) -> (i32, i32) {
    %c0_i32 = arith.constant 0 : i32
    %c0_i32_0 = arith.constant 0 : i32
    %c0_i32_1 = arith.constant 0 : i32
    return %c0_i32, %c0_i32_0 : i32, i32
  }
  func.func @transform_2(%arg0: i32) -> (i32, i32) {
    %c0_i32 = arith.constant 0 : i32
    %c0_i32_0 = arith.constant 0 : i32
    %c0_i32_1 = arith.constant 0 : i32
    return %c0_i32, %c0_i32_0 : i32, i32
  }
}

</mosaic_0001>

<llo_original>
// kernel: loss_balancer.1
$region0: #{loss_balancer.1}
  #allocation0 [shape = 'u32[]', space=smem, size = 0x4, offset = 0x4, fixed_abs, tag = 'smem constant byte address 0x4 - core index']
  #allocation1 [shape = 'u32[144,128]{1,0:T(1,128)}', space=vmem, size = 0x12000, scoped, tag = 'internal scratch']
  #allocation2 [shape = 'f32[1,1]{1,0:T(1,128)}', space=vmem, size = 0x200, scoped, tag = 'scratch operand']
  #allocation3 [shape = 'f32[1,1]{1,0:T(1,128)}', space=vmem, size = 0x200, scoped, tag = 'scratch operand']
  %s0 = inlined_call_operand.vmem [shape: f32[1,8], index: 0, kind: input, shape index: {}]
  %s1 = inlined_call_operand.vmem [shape: f32[1,8], index: 1, kind: input, shape index: {}]
  %s2 = inlined_call_operand.hbm [shape: f32[1,1], index: 2, kind: output, shape index: {}]
  %s3 = sld [smem:[#allocation0]]
  $region26: #{loss_balancer.1} parent=0
    _
  %s5 = ssub.s32 1, %s3
  %s6 = scalar_select 0, %s5, %s3
  $region1: #{loss_balancer.1} parent=0
    #allocation4 [shape = 'u8[512]{0}', space=vmem, size = 0x400, scoped, tag = 'output window, operand 0, single buffered']
    #allocation5 [shape = 's32[1]{0}', space=sflag, size = 0x4, scoped, tag = 'scoped memory for loss_balancer.1']
    %7 = vsyncpa [#allocation5], 0
    // Predicated region
    $region2: #{loss_balancer.1} parent=1 // pred_check
      _
    $region3: #{loss_balancer.1} parent=1 // pred_check_branch
      %9 = sbr.rel (0) target = $region5
    $region4: #{loss_balancer.1} parent=1 // pred_region
      _
    $region5: #{loss_balancer.1} parent=1 // pred_fallthru
      _
    // Predicated region
    $region6: #{loss_balancer.1} parent=1 // pred_check
      _
    $region7: #{loss_balancer.1} parent=1 // pred_check_branch
      %11 = sbr.rel (0) target = $region9
    $region8: #{loss_balancer.1} parent=1 // pred_region
      _
    $region9: #{loss_balancer.1} parent=1 // pred_fallthru
      _
    %p12 = scmp.eq.s32.totalorder 0, 0
    // Predicated region
    $region10: #{loss_balancer.1} parent=1 // pred_check
      %p13 = pneg %p12
    $region11: #{loss_balancer.1} parent=1 // pred_check_branch
      %15 = sbr.rel (%p13) target = $region13
    $region12: #{loss_balancer.1} parent=1 // pred_region
      %vm16 = vcmask 0
      %17 = vst.msk [vmem:[#allocation2] sm:$0x1] %vm16, 0.0
      %18 = vst.msk [vmem:[#allocation3] sm:$0x1] %vm16, 0.0
    $region13: #{loss_balancer.1} parent=1 // pred_fallthru
      _
    %v19 = vld [vmem:[%s1] sm:$0x1]
    %v20 = vmul.f32 %v19, %v19
    %v21 = vadd.f32 %v20, 1e-08
    %v22 = vrcp.pop %v21
    %v23 = vadd.f32 %v19, 1e-08
    %v24 = vlog2.pop %v23
    %v25 = vmul.f32 %v24, 0.6931472
    %v26 = vld [vmem:[%s0] sm:$0x1]
    %v27 = vmul.f32 %v26, %v22
    %v28 = vadd.f32 %v27, %v25
    %vm29 = vcmp.ne.f32.partialorder %v28, %v28
    %vm30 = vmxor %vm29, 1
    %v31 = vsel %vm30, %v28, 0.0
    %v32 = vsel %vm30, 1.0, 0.0
    %v33 = vld [vmem:[#allocation2] sm:$0x1]
    %v34 = vadd.f32 %v31, 0.0
    %vm35 = vcmask 57344
    %v36 = vsel %vm35, %v34, 0.0
    %37 = vadd.xlane.f32.xlu0 %v36
    %v38 = vpop.xlane.xlu0 %37
    %v39 = vadd.f32 %v33, %v38
    %vm40 = vcmask 0
    %41 = vst.msk [vmem:[#allocation2] sm:$0x1] %vm40, %v39
    %v42 = vld [vmem:[#allocation3] sm:$0x1]
    %v43 = vadd.f32 %v32, 0.0
    %v44 = vsel %vm35, %v43, 0.0
    %45 = vadd.xlane.f32.xlu0 %v44
    %v46 = vpop.xlane.xlu0 %45
    %v47 = vadd.f32 %v42, %v46
    %48 = vst.msk [vmem:[#allocation3] sm:$0x1] %vm40, %v47
    // Predicated region
    $region14: #{loss_balancer.1} parent=1 // pred_check
      %p49 = pneg %p12
    $region15: #{loss_balancer.1} parent=1 // pred_check_branch
      %51 = sbr.rel (%p49) target = $region17
    $region16: #{loss_balancer.1} parent=1 // pred_region
      %v52 = vld [vmem:[#allocation2] sm:$0x1]
      %v53 = vld [vmem:[#allocation3] sm:$0x1]
      %v54 = vrcp.pop %v53
      %v55 = vmul.f32 %v52, %v54
      %56 = vst.msk [vmem:[#allocation4] sm:$0x1] %vm40, %v55
    $region17: #{loss_balancer.1} parent=1 // pred_fallthru
      _
    // Predicated region
    $region18: #{loss_balancer.1} parent=1 // pred_check
      _
    $region19: #{loss_balancer.1} parent=1 // pred_check_branch
      %58 = sbr.rel (0) target = $region21
    $region20: #{loss_balancer.1} parent=1 // pred_region
      %s60 = ssub.s32 16, 16
      %61 = vsyncadd [#allocation5], %s60
      %s63 = sshll.u32 [#allocation4], 4
      %s64 = int_to_ptr.vmem [resolvable:$true] %s63
      %66 = dma.vmem_to_hbm [thread:$0]  %s64, 16, %s2, [#allocation5]
    $region21: #{loss_balancer.1} parent=1 // pred_fallthru
      _
    // Predicated region
    $region22: #{loss_balancer.1} parent=1 // pred_check
      _
    $region23: #{loss_balancer.1} parent=1 // pred_check_branch
      %68 = sbr.rel (0) target = $region25
    $region24: #{loss_balancer.1} parent=1 // pred_region
      %69 = dma.done [#allocation5], 16
    $region25: #{loss_balancer.1} parent=1 // pred_fallthru
      _
    %70 = vsyncpa [#allocation5], 1

</llo_original>
